<compile_context>
chip_gen: v6e
topology: v6e:2x2x1
jax: 0.10.0
libtpu: 0.0.40
codegen_flags: <defaults>
</compile_context>

<pallas_src>
import jax
import jax.numpy as jnp
from jax.experimental import pallas as pl
from jax.experimental.pallas import tpu as pltpu

BN_EPS = 1e-5


# ----------------------------- Pallas kernels -------------------------------

def _h_stats_kernel(x_ref, a1_ref, c1_ref, gram_ref, sumh_ref):
    """Accumulate sum(h) and Gram H H^T of the layer-1 activations.

    x_ref: (3, TN), a1_ref: (64, 3), c1_ref: (64, 1)
    gram_ref: (64, 64) accumulator, sumh_ref: (64, 1) accumulator.
    """
    @pl.when(jnp.logical_and(pl.program_id(0) == 0, pl.program_id(1) == 0))
    def _init():
        gram_ref[...] = jnp.zeros_like(gram_ref)
        sumh_ref[...] = jnp.zeros_like(sumh_ref)

    # layer 1 (BN already folded into a1/c1); K=3 matmul is negligible work.
    h = jnp.dot(a1_ref[...], x_ref[...],
                preferred_element_type=jnp.float32) + c1_ref[...]
    h = jnp.maximum(h, 0.0)                                   # (64, TN)

    gram_ref[...] += jax.lax.dot_general(
        h, h, (((1,), (1,)), ((), ())), preferred_element_type=jnp.float32)
    sumh_ref[...] += jnp.sum(h, axis=1, keepdims=True)


def _out_kernel(x_ref, a1_ref, c1_ref, a2_ref, c2_ref, o_ref):
    """Single streaming output pass: recompute h from x, apply folded layer 2.

    x_ref: (3, TN), a1: (64,3), c1: (64,1), a2: (128,64), c2: (128,1),
    o_ref: (128, TN) written straight into the (B, 128, N) output.
    """
    h = jnp.maximum(
        jnp.dot(a1_ref[...], x_ref[...],
                preferred_element_type=jnp.float32) + c1_ref[...], 0.0)
    y = jnp.dot(a2_ref[...], h, preferred_element_type=jnp.float32) + c2_ref[...]
    o_ref[...] = jnp.maximum(y, 0.0)


# ------------------------------- wrapper -------------------------------------

def _pick_tile(n, max_tile=1024):
    """Largest lane-dense point tile that divides N (falls back to full N)."""
    for t in (2048, 1024, 512, 256, 128):
        if t <= max_tile and n % t == 0:
            return t
    return n


def conv_layer_forward(x_ncl, params, *, max_tile=1024):
    """x_ncl: (B, 3, N) float32.  Returns (B, 128, N) float32."""
    B, C_in, N = x_ncl.shape
    assert C_in == 3
    M = B * N
    TN = _pick_tile(N, max_tile)
    grid = (B, N // TN)

    w1, g1, be1 = params["w1"], params["g1"], params["be1"]
    w2, g2, be2 = params["w2"], params["g2"], params["be2"]
    # NOTE: conv biases b1/b2 cancel exactly against the training-mode BN mean
    # subtraction, so they are intentionally not used in the kernel path.

    x32 = x_ncl.astype(jnp.float32)

    # ---- BN1 stats from the 3-channel input moments (tiny reduction) ----
    ex = jnp.mean(x32, axis=(0, 2))                                # (3,)
    exx = jnp.einsum("bcn,bdn->cd", x32, x32) / M                  # (3, 3)
    cov_x = exx - jnp.outer(ex, ex)
    var1 = jnp.maximum(jnp.sum((w1 @ cov_x) * w1, axis=1), 0.0)    # (64,)
    scale1 = g1 * jax.lax.rsqrt(var1 + BN_EPS)                     # (64,)
    a1 = scale1[:, None] * w1                                      # (64, 3)
    c1 = (be1 - scale1 * (w1 @ ex))[:, None]                       # (64, 1)

    cparams_stats = pltpu.CompilerParams(
        dimension_semantics=("arbitrary", "arbitrary"),
        vmem_limit_bytes=32 << 20)
    cparams_out = pltpu.CompilerParams(
        dimension_semantics=("parallel", "parallel"),
        vmem_limit_bytes=32 << 20)

    # ---- phase 1: accumulate layer-1 activation stats (sum + 64x64 Gram) ----
    gram, sumh = pl.pallas_call(
        _h_stats_kernel,
        out_shape=(jax.ShapeDtypeStruct((64, 64), jnp.float32),
                   jax.ShapeDtypeStruct((64, 1), jnp.float32)),
        grid=grid,
        in_specs=[
            pl.BlockSpec((None, 3, TN), lambda b, j: (b, 0, j)),
            pl.BlockSpec((64, 3), lambda b, j: (0, 0)),
            pl.BlockSpec((64, 1), lambda b, j: (0, 0)),
        ],
        out_specs=(
            pl.BlockSpec((64, 64), lambda b, j: (0, 0)),
            pl.BlockSpec((64, 1), lambda b, j: (0, 0)),
        ),
        compiler_params=cparams_stats,
    )(x32, a1, c1)

    # ---- fold BN2 (from E[h] and Gram) into layer-2 weights/bias ----
    mh = sumh[:, 0] / M                                            # (64,)
    cov_h = gram / M - jnp.outer(mh, mh)                           # (64, 64)
    mean2 = w2 @ mh                                                # (128,)
    var2 = jnp.maximum(jnp.sum((w2 @ cov_h) * w2, axis=1), 0.0)    # (128,)
    scale2 = g2 * jax.lax.rsqrt(var2 + BN_EPS)                     # (128,)
    a2 = scale2[:, None] * w2                                      # (128, 64)
    c2 = (be2 - scale2 * mean2)[:, None]                           # (128, 1)

    # ---- phase 2: single streaming output pass, written directly in NCL ----
    out = pl.pallas_call(
        _out_kernel,
        out_shape=jax.ShapeDtypeStruct((B, 128, N), jnp.float32),
        grid=grid,
        in_specs=[
            pl.BlockSpec((None, 3, TN), lambda b, j: (b, 0, j)),
            pl.BlockSpec((64, 3), lambda b, j: (0, 0)),
            pl.BlockSpec((64, 1), lambda b, j: (0, 0)),
            pl.BlockSpec((128, 64), lambda b, j: (0, 0)),
            pl.BlockSpec((128, 1), lambda b, j: (0, 0)),
        ],
        out_specs=pl.BlockSpec((None, 128, TN), lambda b, j: (b, 0, j)),
        compiler_params=cparams_out,
    )(x32, a1, c1, a2, c2)
    return out


# ----------------------------- params / reference ----------------------------

def init_params(key):
    """Shapes match the PyTorch module:
    Conv1d(3,64,1).weight  -> (64, 3)   (kernel dim squeezed), bias (64,)
    Conv1d(64,128,1).weight-> (128, 64),                       bias (128,)
    BatchNorm1d affine gamma/beta per channel.
    """
    k = jax.random.split(key, 8)
    return dict(
        w1=jax.random.normal(k[0], (64, 3), jnp.float32) * 0.3,
        b1=jax.random.normal(k[1], (64,), jnp.float32) * 0.1,
        g1=1.0 + 0.1 * jax.random.normal(k[2], (64,), jnp.float32),
        be1=0.1 * jax.random.normal(k[3], (64,), jnp.float32),
        w2=jax.random.normal(k[4], (128, 64), jnp.float32) * 0.1,
        b2=jax.random.normal(k[5], (128,), jnp.float32) * 0.1,
        g2=1.0 + 0.1 * jax.random.normal(k[6], (128,), jnp.float32),
        be2=0.1 * jax.random.normal(k[7], (128,), jnp.float32),
    )


def reference_forward(x_ncl, p):
    """Pure-JAX reference mirroring the PyTorch training-mode forward
    (conv biases included here; they cancel inside BN)."""
    B, C, N = x_ncl.shape
    x2d = jnp.transpose(x_ncl, (0, 2, 1)).reshape(B * N, C)

    def block(h, w, b, g, be):
        y = h @ w.T + b
        m = jnp.mean(y, axis=0, keepdims=True)
        v = jnp.mean((y - m) ** 2, axis=0, keepdims=True)
        y = (y - m) / jnp.sqrt(v + BN_EPS) * g + be
        return jnp.maximum(y, 0.0)

    h = block(x2d, p["w1"], p["b1"], p["g1"], p["be1"])
    y = block(h, p["w2"], p["b2"], p["g2"], p["be2"])
    return jnp.transpose(y.reshape(B, N, 128), (0, 2, 1))


if __name__ == "__main__":
    key = jax.random.PRNGKey(0)
    kx, kp = jax.random.split(key)

    B, C, N = 2, 3, 384          # small point cloud: 2 clouds x 384 points -> grid (2, 3)
    x = jax.random.normal(kx, (B, C, N), jnp.float32)
    params = init_params(kp)

    out = jax.block_until_ready(conv_layer_forward(x, params))
    ref = reference_forward(x, params)

    assert out.shape == (B, 128, N)
    assert jnp.allclose(out, ref, atol=2e-3, rtol=2e-3), float(jnp.max(jnp.abs(out - ref)))
    print("KERNEL_OK")
</pallas_src>

<mosaic_0001>
module attributes {stable_mosaic.version = 11 : i64} {
  func.func @_h_stats_kernel(%arg0: i32, %arg1: i32, %arg2: memref<1x3x128xf32, #tpu.memory_space<vmem>>, %arg3: memref<64x3xf32, #tpu.memory_space<vmem>>, %arg4: memref<64x1xf32, #tpu.memory_space<vmem>>, %arg5: memref<64x64xf32, #tpu.memory_space<vmem>>, %arg6: memref<64x1xf32, #tpu.memory_space<vmem>>) attributes {dimension_semantics = [#tpu.dimension_semantics<arbitrary>, #tpu.dimension_semantics<arbitrary>], iteration_bounds = array<i64: 2, 3>, scalar_prefetch = 0 : i64, scratch_operands = 0 : i64, tpu.core_type = #tpu.core_type<tc>, window_params = [{transform_indices = @transform_0, window_bounds = array<i64: 1, 3, 128>}, {pipeline_mode = #tpu.pipeline_mode<synchronous>, transform_indices = @transform_1, window_bounds = array<i64: 64, 3>}, {pipeline_mode = #tpu.pipeline_mode<synchronous>, transform_indices = @transform_2, window_bounds = array<i64: 64, 1>}, {pipeline_mode = #tpu.pipeline_mode<synchronous>, transform_indices = @transform_3, window_bounds = array<i64: 64, 64>}, {pipeline_mode = #tpu.pipeline_mode<synchronous>, transform_indices = @transform_4, window_bounds = array<i64: 64, 1>}]} {
    %c0_i32 = arith.constant 0 : i32
    %0 = arith.cmpi eq, %arg0, %c0_i32 : i32
    %c0_i32_0 = arith.constant 0 : i32
    %1 = arith.cmpi eq, %arg1, %c0_i32_0 : i32
    %2 = arith.andi %0, %1 : i1
    %3 = arith.extui %2 : i1 to i32
    %c0_i32_1 = arith.constant 0 : i32
    %4 = arith.cmpi ne, %3, %c0_i32_1 : i32
    scf.if %4 {
      %cst_19 = arith.constant 0.000000e+00 : f32
      %23 = vector.broadcast %cst_19 : f32 to vector<64x64xf32>
      %c0_20 = arith.constant 0 : index
      %c0_21 = arith.constant 0 : index
      %24 = vector.load %arg5[%c0_20, %c0_21] : memref<64x64xf32, #tpu.memory_space<vmem>>, vector<64x64xf32>
      tpu.vector_store %arg5[%c0_20, %c0_21], %23 {strides = array<i32>} : memref<64x64xf32, #tpu.memory_space<vmem>>, vector<64x64xf32>,
      %cst_22 = arith.constant 0.000000e+00 : f32
      %25 = vector.broadcast %cst_22 : f32 to vector<64x1xf32>
      %c0_23 = arith.constant 0 : index
      %c0_24 = arith.constant 0 : index
      %26 = vector.load %arg6[%c0_23, %c0_24] : memref<64x1xf32, #tpu.memory_space<vmem>>, vector<64x1xf32>
      tpu.vector_store %arg6[%c0_23, %c0_24], %25 {strides = array<i32>} : memref<64x1xf32, #tpu.memory_space<vmem>>, vector<64x1xf32>,
    } else {
    }
    %c0 = arith.constant 0 : index
    %c0_2 = arith.constant 0 : index
    %5 = vector.load %arg3[%c0, %c0_2] : memref<64x3xf32, #tpu.memory_space<vmem>>, vector<64x3xf32>
    %c0_3 = arith.constant 0 : index
    %c0_4 = arith.constant 0 : index
    %c0_5 = arith.constant 0 : index
    %6 = vector.load %arg2[%c0_3, %c0_4, %c0_5] : memref<1x3x128xf32, #tpu.memory_space<vmem>>, vector<1x3x128xf32>
    %7 = vector.shape_cast %6 : vector<1x3x128xf32> to vector<3x128xf32>
    %cst = arith.constant dense<0.000000e+00> : vector<64x128xf32>
    %8 = tpu.matmul %5, %7, %cst {dimension_numbers = #tpu.dot_dimension_numbers<[1], [0], [0], [1], [0, 0, 1, 1], [], []>} : vector<64x3xf32>, vector<3x128xf32>, vector<64x128xf32> -> vector<64x128xf32>
    %c0_6 = arith.constant 0 : index
    %c0_7 = arith.constant 0 : index
    %9 = vector.load %arg4[%c0_6, %c0_7] : memref<64x1xf32, #tpu.memory_space<vmem>>, vector<64x1xf32>
    %10 = vector.broadcast %9 : vector<64x1xf32> to vector<64x128xf32>
    %11 = arith.addf %8, %10 : vector<64x128xf32>
    %cst_8 = arith.constant 0.000000e+00 : f32
    %12 = vector.broadcast %cst_8 : f32 to vector<64x128xf32>
    %13 = arith.maximumf %11, %12 : vector<64x128xf32>
    %c0_9 = arith.constant 0 : index
    %c0_10 = arith.constant 0 : index
    %14 = vector.load %arg5[%c0_9, %c0_10] : memref<64x64xf32, #tpu.memory_space<vmem>>, vector<64x64xf32>
    %cst_11 = arith.constant dense<0.000000e+00> : vector<64x64xf32>
    %15 = tpu.matmul %13, %13, %cst_11 {dimension_numbers = #tpu.dot_dimension_numbers<[1], [1], [0], [0], [0, 0, 1, 0], [], []>} : vector<64x128xf32>, vector<64x128xf32>, vector<64x64xf32> -> vector<64x64xf32>
    %16 = arith.addf %14, %15 : vector<64x64xf32>
    %c0_12 = arith.constant 0 : index
    %c0_13 = arith.constant 0 : index
    %17 = vector.load %arg5[%c0_12, %c0_13] : memref<64x64xf32, #tpu.memory_space<vmem>>, vector<64x64xf32>
    tpu.vector_store %arg5[%c0_12, %c0_13], %16 {strides = array<i32>} : memref<64x64xf32, #tpu.memory_space<vmem>>, vector<64x64xf32>,
    %c0_14 = arith.constant 0 : index
    %c0_15 = arith.constant 0 : index
    %18 = vector.load %arg6[%c0_14, %c0_15] : memref<64x1xf32, #tpu.memory_space<vmem>>, vector<64x1xf32>
    %cst_16 = arith.constant dense<0.000000e+00> : vector<64xf32>
    %19 = vector.multi_reduction <add>, %13, %cst_16 [1] : vector<64x128xf32> to vector<64xf32>
    %20 = vector.shape_cast %19 : vector<64xf32> to vector<64x1xf32>
    %21 = arith.addf %18, %20 : vector<64x1xf32>
    %c0_17 = arith.constant 0 : index
    %c0_18 = arith.constant 0 : index
    %22 = vector.load %arg6[%c0_17, %c0_18] : memref<64x1xf32, #tpu.memory_space<vmem>>, vector<64x1xf32>
    tpu.vector_store %arg6[%c0_17, %c0_18], %21 {strides = array<i32>} : memref<64x1xf32, #tpu.memory_space<vmem>>, vector<64x1xf32>,
    return
  }
  func.func @transform_0(%arg0: i32, %arg1: i32) -> (i32, i32, i32) {
    %c0_i32 = arith.constant 0 : i32
    %c0_i32_0 = arith.constant 0 : i32
    return %arg0, %c0_i32, %arg1 : i32, i32, i32
  }
  func.func @transform_1(%arg0: i32, %arg1: i32) -> (i32, i32) {
    %c0_i32 = arith.constant 0 : i32
    %c0_i32_0 = arith.constant 0 : i32
    %c0_i32_1 = arith.constant 0 : i32
    return %c0_i32, %c0_i32_0 : i32, i32
  }
  func.func @transform_2(%arg0: i32, %arg1: i32) -> (i32, i32) {
    %c0_i32 = arith.constant 0 : i32
    %c0_i32_0 = arith.constant 0 : i32
    %c0_i32_1 = arith.constant 0 : i32
    return %c0_i32, %c0_i32_0 : i32, i32
  }
  func.func @transform_3(%arg0: i32, %arg1: i32) -> (i32, i32) {
    %c0_i32 = arith.constant 0 : i32
    %c0_i32_0 = arith.constant 0 : i32
    %c0_i32_1 = arith.constant 0 : i32
    return %c0_i32, %c0_i32_0 : i32, i32
  }
  func.func @transform_4(%arg0: i32, %arg1: i32) -> (i32, i32) {
    %c0_i32 = arith.constant 0 : i32
    %c0_i32_0 = arith.constant 0 : i32
    %c0_i32_1 = arith.constant 0 : i32
    return %c0_i32, %c0_i32_0 : i32, i32
  }
}

</mosaic_0001>

<llo_original>
// kernel: tpu_custom_call.1
$region0: #{tpu_custom_call.1}
  #allocation0 [shape = 'u32[]', space=smem, size = 0x4, offset = 0x4, fixed_abs, tag = 'smem constant byte address 0x4 - core index']
  #allocation1 [shape = 'u32[144,128]{1,0:T(1,128)}', space=vmem, size = 0x12000, scoped, tag = 'internal scratch']
  %s0 = inlined_call_operand.vmem [shape: f32[2,3,384], index: 0, kind: input, shape index: {}]
  %s1 = inlined_call_operand.vmem [shape: f32[64,3], index: 1, kind: input, shape index: {}]
  %s2 = inlined_call_operand.vmem [shape: f32[64,1], index: 2, kind: input, shape index: {}]
  %s3 = inlined_call_operand.hbm [shape: f32[64,64], index: 3, kind: output, shape index: {0}]
  %s4 = inlined_call_operand.vmem [shape: f32[64,1], index: 4, kind: output, shape index: {1}]
  %5 = xla_tuple %s3, %s4
  %s6 = sld [smem:[#allocation0]]
  $region57: #{tpu_custom_call.1} parent=0
    _
  %s8 = ssub.s32 1, %s6
  %s9 = scalar_select 0, %s8, %s6
  $region1: #{tpu_custom_call.1} parent=0
    #allocation2 [shape = 'u8[32768]{0}', space=vmem, size = 0x8000, scoped, tag = 'output window, operand 0, single buffered']
    #allocation3 [shape = 's32[2]{0}', space=sflag, size = 0x8, scoped, tag = 'scoped memory for tpu_custom_call.1']
    %10 = vsyncpa [#allocation3], 0
    loop: start=0, step=1, limit=8
    $region2: #{tpu_custom_call.1} parent=1 // loop_pre_header
      _
    $region3: #{tpu_custom_call.1} parent=1 // loop_header
      %s12 = sphi 0, %s16
      %p13 = scmp.ge.s32.totalorder %s12, 8
      %s19 = sphi 0, %s31
      %s20 = sphi 0, %s27
      %s21 = sphi 0, %s19
      %s22 = sphi 0, %s20
      %s23 = sphi 0, %s21
      %s24 = sphi 0, %s22
      %s36 = sphi 0, %s38
      %s39 = sphi 0, %s36
      %s40 = sphi 0, %s39
      %s56 = sphi 0, %s40
      %s60 = sphi 0, %s60
      %s62 = sphi 0, %s60
      %s63 = sphi 0, %s62
      %s77 = sphi 0, %s63
      %s81 = sphi 0, %s81
      %s83 = sphi 0, %s81
      %s84 = sphi 0, %s83
      %s98 = sphi 0, %s84
      %s102 = sphi 0, %s102
      %s104 = sphi 0, %s102
      %s105 = sphi 0, %s104
      %s119 = sphi 0, %s105
      %s123 = sphi 0, %s123
      %s125 = sphi 0, %s123
      %s126 = sphi 0, %s125
      %s140 = sphi 0, %s126
    $region4: #{tpu_custom_call.1} parent=1 // loop_header_branch
      %15 = sbr.rel (%p13) target = $region8
    $region5: #{tpu_custom_call.1} parent=1 // loop_body
      %s17 = ssub.s32 %s12, 1
      %s18 = ssub.s32 %s12, 2
      %s25 = sadd.s32 1, %s20
      %p26 = scmp.ge.s32.totalorder %s25, 3
      %s27 = scalar_select %p26, 0, %s25
      %s28 = sadd.s32 1, %s19
      %s29 = scalar_select %p26, %s28, %s19
      %p30 = scmp.ge.s32.totalorder %s29, 2
      %s31 = scalar_select %p30, 0, %s29
      %s32 = ssub.s32 %s19, %s31
      %s33 = ssub.s32 %s20, %s27
      %s34 = sor.u32 %s32, %s33
      %p35 = scmp.eq.s32.totalorder %s34, 0
      %s37 = sadd.s32 %s36, 1
      %s38 = scalar_select %p35, %s36, %s37
      %p41 = pneg %p35
      %p42 = scmp.eq.s32.totalorder %s12, 5
      %p43 = por %p41, %p42
      %p44 = scmp.ne.s32.totalorder %s36, %s39
      %p45 = scmp.eq.s32.totalorder %s12, 0
      %p46 = por %p44, %p45
      %p47 = scmp.ne.s32.totalorder %s36, %s39
      %p48 = scmp.eq.s32.totalorder %s17, 5
      %p49 = por %p47, %p48
      %p50 = scmp.ne.s32.totalorder %s39, %s40
      %p51 = scmp.eq.s32.totalorder %s17, 0
      %p52 = por %p50, %p51
      %p53 = scmp.ne.s32.totalorder %s39, %s40
      %p54 = scmp.eq.s32.totalorder %s18, 5
      %p55 = por %p53, %p54
      %p57 = scmp.ne.s32.totalorder %s40, %s56
      %p58 = scmp.eq.s32.totalorder %s18, 0
      %p59 = por %p57, %p58
      %s61 = sadd.s32 %s60, 1
      %p64 = scmp.eq.s32.totalorder %s12, 5
      %p65 = scmp.ne.s32.totalorder %s60, %s62
      %p66 = scmp.eq.s32.totalorder %s12, 0
      %p67 = por %p65, %p66
      %p68 = scmp.ne.s32.totalorder %s60, %s62
      %p69 = scmp.eq.s32.totalorder %s17, 5
      %p70 = por %p68, %p69
      %p71 = scmp.ne.s32.totalorder %s62, %s63
      %p72 = scmp.eq.s32.totalorder %s17, 0
      %p73 = por %p71, %p72
      %p74 = scmp.ne.s32.totalorder %s62, %s63
      %p75 = scmp.eq.s32.totalorder %s18, 5
      %p76 = por %p74, %p75
      %p78 = scmp.ne.s32.totalorder %s63, %s77
      %p79 = scmp.eq.s32.totalorder %s18, 0
      %p80 = por %p78, %p79
      %s82 = sadd.s32 %s81, 1
      %p85 = scmp.eq.s32.totalorder %s12, 5
      %p86 = scmp.ne.s32.totalorder %s81, %s83
      %p87 = scmp.eq.s32.totalorder %s12, 0
      %p88 = por %p86, %p87
      %p89 = scmp.ne.s32.totalorder %s81, %s83
      %p90 = scmp.eq.s32.totalorder %s17, 5
      %p91 = por %p89, %p90
      %p92 = scmp.ne.s32.totalorder %s83, %s84
      %p93 = scmp.eq.s32.totalorder %s17, 0
      %p94 = por %p92, %p93
      %p95 = scmp.ne.s32.totalorder %s83, %s84
      %p96 = scmp.eq.s32.totalorder %s18, 5
      %p97 = por %p95, %p96
      %p99 = scmp.ne.s32.totalorder %s84, %s98
      %p100 = scmp.eq.s32.totalorder %s18, 0
      %p101 = por %p99, %p100
      %s103 = sadd.s32 %s102, 1
      %p106 = scmp.eq.s32.totalorder %s12, 5
      %p107 = scmp.ne.s32.totalorder %s102, %s104
      %p108 = scmp.eq.s32.totalorder %s12, 0
      %p109 = por %p107, %p108
      %p110 = scmp.ne.s32.totalorder %s102, %s104
      %p111 = scmp.eq.s32.totalorder %s17, 5
      %p112 = por %p110, %p111
      %p113 = scmp.ne.s32.totalorder %s104, %s105
      %p114 = scmp.eq.s32.totalorder %s17, 0
      %p115 = por %p113, %p114
      %p116 = scmp.ne.s32.totalorder %s104, %s105
      %p117 = scmp.eq.s32.totalorder %s18, 5
      %p118 = por %p116, %p117
      %p120 = scmp.ne.s32.totalorder %s105, %s119
      %p121 = scmp.eq.s32.totalorder %s18, 0
      %p122 = por %p120, %p121
      %s124 = sadd.s32 %s123, 1
      %p127 = scmp.eq.s32.totalorder %s12, 5
      %p128 = scmp.ne.s32.totalorder %s123, %s125
      %p129 = scmp.eq.s32.totalorder %s12, 0
      %p130 = por %p128, %p129
      %p131 = scmp.ne.s32.totalorder %s123, %s125
      %p132 = scmp.eq.s32.totalorder %s17, 5
      %p133 = por %p131, %p132
      %p134 = scmp.ne.s32.totalorder %s125, %s126
      %p135 = scmp.eq.s32.totalorder %s17, 0
      %p136 = por %p134, %p135
      %p137 = scmp.ne.s32.totalorder %s125, %s126
      %p138 = scmp.eq.s32.totalorder %s18, 5
      %p139 = por %p137, %p138
      %p141 = scmp.ne.s32.totalorder %s126, %s140
      %p142 = scmp.eq.s32.totalorder %s18, 0
      %p143 = por %p141, %p142
      %p144 = scmp.le.s32.totalorder 1, %s12
      %p145 = scmp.lt.s32.totalorder %s12, 7
      %p146 = pnand %p144, %p145
      %p147 = pneg %p146
      // Predicated region
      $region9: #{tpu_custom_call.1} parent=5 // pred_check
        _
      $region10: #{tpu_custom_call.1} parent=5 // pred_check_branch
        %149 = sbr.rel (%p146) target = $region12
      $region11: #{tpu_custom_call.1} parent=5 // pred_region
        %s150 = ssub.s32 %s12, 1
        // Predicated region
        $region13: #{tpu_custom_call.1} parent=11 // pred_check
          %p151 = pneg %p73
        $region14: #{tpu_custom_call.1} parent=11 // pred_check_branch
          %153 = sbr.rel (%p151) target = $region16
        $region15: #{tpu_custom_call.1} parent=11 // pred_region
          _
        $region16: #{tpu_custom_call.1} parent=11 // pred_fallthru
          _
        // Predicated region
        $region17: #{tpu_custom_call.1} parent=11 // pred_check
          %p154 = pneg %p94
        $region18: #{tpu_custom_call.1} parent=11 // pred_check_branch
          %156 = sbr.rel (%p154) target = $region20
        $region19: #{tpu_custom_call.1} parent=11 // pred_region
          _
        $region20: #{tpu_custom_call.1} parent=11 // pred_fallthru
          _
      $region12: #{tpu_custom_call.1} parent=5 // pred_fallthru
        _
      %p157 = scmp.lt.s32.totalorder %s12, 6
      // Predicated region
      $region21: #{tpu_custom_call.1} parent=5 // pred_check
        %p158 = pneg %p157
      $region22: #{tpu_custom_call.1} parent=5 // pred_check_branch
        %160 = sbr.rel (%p158) target = $region24
      $region23: #{tpu_custom_call.1} parent=5 // pred_region
        // Predicated region
        $region25: #{tpu_custom_call.1} parent=23 // pred_check
          %p161 = pneg %p46
        $region26: #{tpu_custom_call.1} parent=23 // pred_check_branch
          %163 = sbr.rel (%p161) target = $region28
        $region27: #{tpu_custom_call.1} parent=23 // pred_region
          %p164 = scmp.lt.s32.totalorder %s19, 1
          %s165 = scalar_select %p164, %s19, 1
          %p166 = scmp.lt.s32.totalorder %s20, 2
          %s167 = scalar_select %p166, %s20, 2
          %s168 = smul.addr %s165, 3
          %s169 = sadd.s32 %s167, %s168
          %s170 = smul.addr %s169, 4
          %s171 = scalar_lea.vmem %s0, %s170
        $region28: #{tpu_custom_call.1} parent=23 // pred_fallthru
          _
      $region24: #{tpu_custom_call.1} parent=5 // pred_fallthru
        _
      %p172 = scmp.le.s32.totalorder 1, %s12
      %p173 = scmp.lt.s32.totalorder %s12, 7
      %p174 = pnand %p172, %p173
      %p175 = pneg %p174
      // Predicated region
      $region29: #{tpu_custom_call.1} parent=5 // pred_check
        _
      $region30: #{tpu_custom_call.1} parent=5 // pred_check_branch
        %177 = sbr.rel (%p174) target = $region32
      $region31: #{tpu_custom_call.1} parent=5 // pred_region
        %s178 = ssub.s32 %s12, 1
        %p179 = scmp.lt.s32.totalorder %s21, 1
        %s180 = scalar_select %p179, %s21, 1
        %p181 = scmp.lt.s32.totalorder %s22, 2
        %s182 = scalar_select %p181, %s22, 2
        %s183 = smul.addr %s180, 3
        %s184 = sadd.s32 %s182, %s183
        %s185 = smul.addr %s184, 4
        %s186 = scalar_lea.vmem %s0, %s185
        %p187 = pneg %p52
        %p188 = pneg %p49
        %p189 = pneg %p73
        %p190 = pneg %p70
        %p191 = pneg %p94
        %p192 = pneg %p91
        %p193 = pneg %p115
        %p194 = pneg %p112
        %p195 = pneg %p136
        %p196 = pneg %p133
        %p197 = scmp.lt.s32.totalorder %s21, 1
        %s198 = scalar_select %p197, %s21, 1
        %p199 = scmp.lt.s32.totalorder %s22, 2
        %s200 = scalar_select %p199, %s22, 2
        %s201 = smul.addr %s198, 3
        %s202 = sadd.s32 %s200, %s201
        %s203 = smul.addr %s202, 4
        %s204 = scalar_lea.vmem %s0, %s203
        %p205 = scmp.eq.s32.totalorder %s21, 0
        %p206 = scmp.eq.s32.totalorder %s22, 0
        %p207 = pnand %p205, %p206
        %p208 = pneg %p207
        // Predicated region
        $region33: #{tpu_custom_call.1} parent=31 // pred_check
          _
        $region34: #{tpu_custom_call.1} parent=31 // pred_check_branch
          %210 = sbr.rel (%p207) target = $region36
        $region35: #{tpu_custom_call.1} parent=31 // pred_region
          %vm211 = vcmask 523264
          %212 = vst.msk [vmem:[#allocation2] sm:$0xff] %vm211, 0.0
          %213 = vst.msk [vmem:[#allocation2 + $0x8] sm:$0xff] %vm211, 0.0
          %214 = vst.msk [vmem:[#allocation2 + $0x10] sm:$0xff] %vm211, 0.0
          %215 = vst.msk [vmem:[#allocation2 + $0x18] sm:$0xff] %vm211, 0.0
          %216 = vst.msk [vmem:[#allocation2 + $0x20] sm:$0xff] %vm211, 0.0
          %217 = vst.msk [vmem:[#allocation2 + $0x28] sm:$0xff] %vm211, 0.0
          %218 = vst.msk [vmem:[#allocation2 + $0x30] sm:$0xff] %vm211, 0.0
          %219 = vst.msk [vmem:[#allocation2 + $0x38] sm:$0xff] %vm211, 0.0
          %vm220 = vcmask 7168
          %221 = vst.msk [vmem:[%s4] sm:$0xff] %vm220, 0.0
          %222 = vst.msk [vmem:[%s4 + $0x8] sm:$0xff] %vm220, 0.0
          %223 = vst.msk [vmem:[%s4 + $0x10] sm:$0xff] %vm220, 0.0
          %224 = vst.msk [vmem:[%s4 + $0x18] sm:$0xff] %vm220, 0.0
          %225 = vst.msk [vmem:[%s4 + $0x20] sm:$0xff] %vm220, 0.0
          %226 = vst.msk [vmem:[%s4 + $0x28] sm:$0xff] %vm220, 0.0
          %227 = vst.msk [vmem:[%s4 + $0x30] sm:$0xff] %vm220, 0.0
          %228 = vst.msk [vmem:[%s4 + $0x38] sm:$0xff] %vm220, 0.0
        $region36: #{tpu_custom_call.1} parent=31 // pred_fallthru
          _
        %v229 = vld [vmem:[%s1] sm:$0xff]
        %v230 = vld [vmem:[%s1 + $0x8] sm:$0xff]
        %v231 = vld [vmem:[%s1 + $0x10] sm:$0xff]
        %v232 = vld [vmem:[%s1 + $0x18] sm:$0xff]
        %v233 = vld [vmem:[%s1 + $0x20] sm:$0xff]
        %v234 = vld [vmem:[%s1 + $0x28] sm:$0xff]
        %v235 = vld [vmem:[%s1 + $0x30] sm:$0xff]
        %v236 = vld [vmem:[%s1 + $0x38] sm:$0xff]
        %v237 = vld [vmem:[%s204] sm:$0x7]
        %v238 = vld [vmem:[%s2] sm:$0xff]
        %v239 = vld [vmem:[%s2 + $0x8] sm:$0xff]
        %v240 = vld [vmem:[%s2 + $0x10] sm:$0xff]
        %v241 = vld [vmem:[%s2 + $0x18] sm:$0xff]
        %v242 = vld [vmem:[%s2 + $0x20] sm:$0xff]
        %v243 = vld [vmem:[%s2 + $0x28] sm:$0xff]
        %v244 = vld [vmem:[%s2 + $0x30] sm:$0xff]
        %v245 = vld [vmem:[%s2 + $0x38] sm:$0xff]
        %247 = vset.pattern.permute.xlu0 0
        %248 = vperm.xlu0 %247, %v238
        %v249 = vpop.permute.xlu0 %248
        %252 = vset.pattern.permute.xlu0 0
        %253 = vperm.xlu0 %252, %v239
        %v254 = vpop.permute.xlu0 %253
        %257 = vset.pattern.permute.xlu0 0
        %258 = vperm.xlu0 %257, %v240
        %v259 = vpop.permute.xlu0 %258
        %262 = vset.pattern.permute.xlu0 0
        %263 = vperm.xlu0 %262, %v241
        %v264 = vpop.permute.xlu0 %263
        %267 = vset.pattern.permute.xlu0 0
        %268 = vperm.xlu0 %267, %v242
        %v269 = vpop.permute.xlu0 %268
        %272 = vset.pattern.permute.xlu0 0
        %273 = vperm.xlu0 %272, %v243
        %v274 = vpop.permute.xlu0 %273
        %277 = vset.pattern.permute.xlu0 0
        %278 = vperm.xlu0 %277, %v244
        %v279 = vpop.permute.xlu0 %278
        %282 = vset.pattern.permute.xlu0 0
        %283 = vperm.xlu0 %282, %v245
        %v284 = vpop.permute.xlu0 %283
        %vm286 = vcmask 23552
        %v288 = vsel %vm286, %v229, 0
        %v291 = vsel %vm286, %v230, 0
        %v294 = vsel %vm286, %v231, 0
        %v297 = vsel %vm286, %v232, 0
        %v300 = vsel %vm286, %v233, 0
        %v303 = vsel %vm286, %v234, 0
        %v306 = vsel %vm286, %v235, 0
        %v309 = vsel %vm286, %v236, 0
        %vm311 = vcmask 1042432
        %v313 = vsel %vm311, %v237, 0
        %315 = vmatprep.subr.mxu0 0.0
        %316 = vmatpush1.msra.mxu0 0.0
        %317 = vmatprep.subr.mxu0 0.0
        %318 = vmatpush1.msra.mxu0 0.0
        %319 = vmatprep.subr.mxu0 0.0
        %320 = vmatpush1.msra.mxu0 0.0
        %321 = vmatprep.subr.mxu0 0.0
        %322 = vmatpush1.msra.mxu0 0.0
        %323 = vmatprep.subr.mxu0 0.0
        %324 = vmatpush1.msra.mxu0 0.0
        %325 = vmatprep.subr.mxu0 0.0
        %326 = vmatpush1.msra.mxu0 0.0
        %327 = vmatprep.subr.mxu0 0.0
        %328 = vmatpush1.msra.mxu0 0.0
        %329 = vmatprep.subr.mxu0 0.0
        %330 = vmatpush1.msra.mxu0 0.0
        %331 = vmatprep.subr.mxu0 0.0
        %332 = vmatpush1.msra.mxu0 0.0
        %333 = vmatprep.subr.mxu0 0.0
        %334 = vmatpush1.msra.mxu0 0.0
        %335 = vmatprep.subr.mxu0 0.0
        %336 = vmatpush1.msra.mxu0 0.0
        %337 = vmatprep.subr.mxu0 0.0
        %338 = vmatpush1.msra.mxu0 0.0
        %339 = vmatprep.subr.mxu0 0.0
        %340 = vmatpush1.msra.mxu0 0.0
        %341 = vmatprep.subr.mxu0 0.0
        %342 = vmatpush1.msra.mxu0 0.0
        %343 = vmatprep.subr.mxu0 0.0
        %344 = vmatpush1.msra.mxu0 0.0
        %345 = vmatprep.subr.mxu0 0.0
        %346 = vmatpush1.msra.mxu0 %v313
        %347 = vmatprep.subr.mxu0 0.0
        %348 = vmatpush2.msra.mxu0 0.0
        %349 = vmatprep.subr.mxu0 0.0
        %350 = vmatpush2.msra.mxu0 0.0
        %351 = vmatprep.subr.mxu0 0.0
        %352 = vmatpush2.msra.mxu0 0.0
        %353 = vmatprep.subr.mxu0 0.0
        %354 = vmatpush2.msra.mxu0 0.0
        %355 = vmatprep.subr.mxu0 0.0
        %356 = vmatpush2.msra.mxu0 0.0
        %357 = vmatprep.subr.mxu0 0.0
        %358 = vmatpush2.msra.mxu0 0.0
        %359 = vmatprep.subr.mxu0 0.0
        %360 = vmatpush2.msra.mxu0 0.0
        %361 = vmatprep.subr.mxu0 0.0
        %362 = vmatpush2.msra.mxu0 0.0
        %363 = vmatprep.subr.mxu0 0.0
        %364 = vmatpush2.msra.mxu0 0.0
        %365 = vmatprep.subr.mxu0 0.0
        %366 = vmatpush2.msra.mxu0 0.0
        %367 = vmatprep.subr.mxu0 0.0
        %368 = vmatpush2.msra.mxu0 0.0
        %369 = vmatprep.subr.mxu0 0.0
        %370 = vmatpush2.msra.mxu0 0.0
        %371 = vmatprep.subr.mxu0 0.0
        %372 = vmatpush2.msra.mxu0 0.0
        %373 = vmatprep.subr.mxu0 0.0
        %374 = vmatpush2.msra.mxu0 0.0
        %375 = vmatprep.subr.mxu0 0.0
        %376 = vmatpush2.msra.mxu0 0.0
        %377 = vmatprep.subr.mxu0 0.0
        %378 = vmatpush2.msra.mxu0 0.0
        %379 = vmatprep.mubr.f32.mxu0 0.0
        %380 = vmatmul.mubr.f32.gmra.mxu0 %v288
        %v381 = vpop.f32.mrf.mxu0
        %v382 = vadd.f32 %v249, %v381
        %v383 = vpop.f32.mrf.mxu0
        %384 = vmatprep.mubr.f32.mxu0 0.0
        %385 = vmatmul.mubr.f32.gmra.mxu0 %v291
        %v386 = vpop.f32.mrf.mxu0
        %v387 = vadd.f32 %v254, %v386
        %v388 = vpop.f32.mrf.mxu0
        %389 = vmatprep.mubr.f32.mxu0 0.0
        %390 = vmatmul.mubr.f32.gmra.mxu0 %v294
        %v391 = vpop.f32.mrf.mxu0
        %v392 = vadd.f32 %v259, %v391
        %v393 = vpop.f32.mrf.mxu0
        %394 = vmatprep.mubr.f32.mxu0 0.0
        %395 = vmatmul.mubr.f32.gmra.mxu0 %v297
        %v396 = vpop.f32.mrf.mxu0
        %v397 = vadd.f32 %v264, %v396
        %v398 = vpop.f32.mrf.mxu0
        %399 = vmatprep.mubr.f32.mxu0 0.0
        %400 = vmatmul.mubr.f32.gmra.mxu0 %v300
        %v401 = vpop.f32.mrf.mxu0
        %v402 = vadd.f32 %v269, %v401
        %v403 = vpop.f32.mrf.mxu0
        %404 = vmatprep.mubr.f32.mxu0 0.0
        %405 = vmatmul.mubr.f32.gmra.mxu0 %v303
        %v406 = vpop.f32.mrf.mxu0
        %v407 = vadd.f32 %v274, %v406
        %v408 = vpop.f32.mrf.mxu0
        %409 = vmatprep.mubr.f32.mxu0 0.0
        %410 = vmatmul.mubr.f32.gmra.mxu0 %v306
        %v411 = vpop.f32.mrf.mxu0
        %v412 = vadd.f32 %v279, %v411
        %v413 = vpop.f32.mrf.mxu0
        %414 = vmatprep.mubr.f32.mxu0 0.0
        %415 = vmatmul.mubr.f32.gmra.mxu0 %v309
        %v416 = vpop.f32.mrf.mxu0
        %v417 = vadd.f32 %v284, %v416
        %v418 = vpop.f32.mrf.mxu0
        %419 = vdwg.mxu0
        %v420 = vmax.f32 %v382, 0.0
        %v421 = vmax.f32 %v387, 0.0
        %v422 = vmax.f32 %v392, 0.0
        %v423 = vmax.f32 %v397, 0.0
        %v424 = vmax.f32 %v402, 0.0
        %v425 = vmax.f32 %v407, 0.0
        %v426 = vmax.f32 %v412, 0.0
        %v427 = vmax.f32 %v417, 0.0
        %v428 = vld [vmem:[#allocation2] sm:$0xff]
        %v429 = vld [vmem:[#allocation2 + $0x8] sm:$0xff]
        %v430 = vld [vmem:[#allocation2 + $0x10] sm:$0xff]
        %v431 = vld [vmem:[#allocation2 + $0x18] sm:$0xff]
        %v432 = vld [vmem:[#allocation2 + $0x20] sm:$0xff]
        %v433 = vld [vmem:[#allocation2 + $0x28] sm:$0xff]
        %v434 = vld [vmem:[#allocation2 + $0x30] sm:$0xff]
        %v435 = vld [vmem:[#allocation2 + $0x38] sm:$0xff]
        %436 = vmatprep.subr.mxu0 0.0
        %437 = vmatpush1.xpose.msra.mxu0 0.0
        %438 = vmatprep.subr.mxu0 0.0
        %439 = vmatpush1.xpose.msra.mxu0 0.0
        %440 = vmatprep.subr.mxu0 0.0
        %441 = vmatpush1.xpose.msra.mxu0 0.0
        %442 = vmatprep.subr.mxu0 0.0
        %443 = vmatpush1.xpose.msra.mxu0 0.0
        %444 = vmatprep.subr.mxu0 0.0
        %445 = vmatpush1.xpose.msra.mxu0 0.0
        %446 = vmatprep.subr.mxu0 0.0
        %447 = vmatpush1.xpose.msra.mxu0 0.0
        %448 = vmatprep.subr.mxu0 0.0
        %449 = vmatpush1.xpose.msra.mxu0 0.0
        %450 = vmatprep.subr.mxu0 0.0
        %451 = vmatpush1.xpose.msra.mxu0 0.0
        %452 = vmatprep.subr.mxu0 0.0
        %453 = vmatpush1.xpose.msra.mxu0 %v427
        %454 = vmatprep.subr.mxu0 0.0
        %455 = vmatpush1.xpose.msra.mxu0 %v426
        %456 = vmatprep.subr.mxu0 0.0
        %457 = vmatpush1.xpose.msra.mxu0 %v425
        %458 = vmatprep.subr.mxu0 0.0
        %459 = vmatpush1.xpose.msra.mxu0 %v424
        %460 = vmatprep.subr.mxu0 0.0
        %461 = vmatpush1.xpose.msra.mxu0 %v423
        %462 = vmatprep.subr.mxu0 0.0
        %463 = vmatpush1.xpose.msra.mxu0 %v422
        %464 = vmatprep.subr.mxu0 0.0
        %465 = vmatpush1.xpose.msra.mxu0 %v421
        %466 = vmatprep.subr.mxu0 0.0
        %467 = vmatpush1.xpose.msra.mxu0 %v420
        %468 = vmatprep.subr.mxu0 0.0
        %469 = vmatpush2.xpose.msra.mxu0 0.0
        %470 = vmatprep.subr.mxu0 0.0
        %471 = vmatpush2.xpose.msra.mxu0 0.0
        %472 = vmatprep.subr.mxu0 0.0
        %473 = vmatpush2.xpose.msra.mxu0 0.0
        %474 = vmatprep.subr.mxu0 0.0
        %475 = vmatpush2.xpose.msra.mxu0 0.0
        %476 = vmatprep.subr.mxu0 0.0
        %477 = vmatpush2.xpose.msra.mxu0 0.0
        %478 = vmatprep.subr.mxu0 0.0
        %479 = vmatpush2.xpose.msra.mxu0 0.0
        %480 = vmatprep.subr.mxu0 0.0
        %481 = vmatpush2.xpose.msra.mxu0 0.0
        %482 = vmatprep.subr.mxu0 0.0
        %483 = vmatpush2.xpose.msra.mxu0 0.0
        %484 = vmatprep.subr.mxu0 0.0
        %485 = vmatpush2.xpose.msra.mxu0 0.0
        %486 = vmatprep.subr.mxu0 0.0
        %487 = vmatpush2.xpose.msra.mxu0 0.0
        %488 = vmatprep.subr.mxu0 0.0
        %489 = vmatpush2.xpose.msra.mxu0 0.0
        %490 = vmatprep.subr.mxu0 0.0
        %491 = vmatpush2.xpose.msra.mxu0 0.0
        %492 = vmatprep.subr.mxu0 0.0
        %493 = vmatpush2.xpose.msra.mxu0 0.0
        %494 = vmatprep.subr.mxu0 0.0
        %495 = vmatpush2.xpose.msra.mxu0 0.0
        %496 = vmatprep.subr.mxu0 0.0
        %497 = vmatpush2.xpose.msra.mxu0 0.0
        %498 = vmatprep.subr.mxu0 0.0
        %499 = vmatpush2.xpose.msra.mxu0 0.0
        %500 = vmatprep.mubr.f32.mxu0 0.0
        %501 = vmatmul.mubr.f32.gmra.mxu0 %v420
        %v502 = vpop.f32.mrf.mxu0
        %v503 = vadd.f32 0.0, %v502
        %v504 = vpop.f32.mrf.mxu0
        %505 = vmatprep.mubr.f32.mxu0 0.0
        %506 = vmatmul.mubr.f32.gmra.mxu0 %v421
        %v507 = vpop.f32.mrf.mxu0
        %v508 = vadd.f32 0.0, %v507
        %v509 = vpop.f32.mrf.mxu0
        %510 = vmatprep.mubr.f32.mxu0 0.0
        %511 = vmatmul.mubr.f32.gmra.mxu0 %v422
        %v512 = vpop.f32.mrf.mxu0
        %v513 = vadd.f32 0.0, %v512
        %v514 = vpop.f32.mrf.mxu0
        %515 = vmatprep.mubr.f32.mxu0 0.0
        %516 = vmatmul.mubr.f32.gmra.mxu0 %v423
        %v517 = vpop.f32.mrf.mxu0
        %v518 = vadd.f32 0.0, %v517
        %v519 = vpop.f32.mrf.mxu0
        %520 = vmatprep.mubr.f32.mxu0 0.0
        %521 = vmatmul.mubr.f32.gmra.mxu0 %v424
        %v522 = vpop.f32.mrf.mxu0
        %v523 = vadd.f32 0.0, %v522
        %v524 = vpop.f32.mrf.mxu0
        %525 = vmatprep.mubr.f32.mxu0 0.0
        %526 = vmatmul.mubr.f32.gmra.mxu0 %v425
        %v527 = vpop.f32.mrf.mxu0
        %v528 = vadd.f32 0.0, %v527
        %v529 = vpop.f32.mrf.mxu0
        %530 = vmatprep.mubr.f32.mxu0 0.0
        %531 = vmatmul.mubr.f32.gmra.mxu0 %v426
        %v532 = vpop.f32.mrf.mxu0
        %v533 = vadd.f32 0.0, %v532
        %v534 = vpop.f32.mrf.mxu0
        %535 = vmatprep.mubr.f32.mxu0 0.0
        %536 = vmatmul.mubr.f32.gmra.mxu0 %v427
        %v537 = vpop.f32.mrf.mxu0
        %v538 = vadd.f32 0.0, %v537
        %v539 = vpop.f32.mrf.mxu0
        %540 = vdwg.mxu0
        %v541 = vadd.f32 %v428, %v503
        %v542 = vadd.f32 %v429, %v508
        %v543 = vadd.f32 %v430, %v513
        %v544 = vadd.f32 %v431, %v518
        %v545 = vadd.f32 %v432, %v523
        %v546 = vadd.f32 %v433, %v528
        %v547 = vadd.f32 %v434, %v533
        %v548 = vadd.f32 %v435, %v538
        %vm549 = vcmask 523264
        %550 = vst.msk [vmem:[#allocation2] sm:$0xff] %vm549, %v541
        %551 = vst.msk [vmem:[#allocation2 + $0x8] sm:$0xff] %vm549, %v542
        %552 = vst.msk [vmem:[#allocation2 + $0x10] sm:$0xff] %vm549, %v543
        %553 = vst.msk [vmem:[#allocation2 + $0x18] sm:$0xff] %vm549, %v544
        %554 = vst.msk [vmem:[#allocation2 + $0x20] sm:$0xff] %vm549, %v545
        %555 = vst.msk [vmem:[#allocation2 + $0x28] sm:$0xff] %vm549, %v546
        %556 = vst.msk [vmem:[#allocation2 + $0x30] sm:$0xff] %vm549, %v547
        %557 = vst.msk [vmem:[#allocation2 + $0x38] sm:$0xff] %vm549, %v548
        %v558 = vld [vmem:[%s4] sm:$0xff]
        %v559 = vld [vmem:[%s4 + $0x8] sm:$0xff]
        %v560 = vld [vmem:[%s4 + $0x10] sm:$0xff]
        %v561 = vld [vmem:[%s4 + $0x18] sm:$0xff]
        %v562 = vld [vmem:[%s4 + $0x20] sm:$0xff]
        %v563 = vld [vmem:[%s4 + $0x28] sm:$0xff]
        %v564 = vld [vmem:[%s4 + $0x30] sm:$0xff]
        %v565 = vld [vmem:[%s4 + $0x38] sm:$0xff]
        %566 = vadd.xlane.f32.xlu0 %v420
        %v567 = vpop.xlane.xlu0 %566
        %568 = vadd.xlane.f32.xlu0 %v421
        %v569 = vpop.xlane.xlu0 %568
        %570 = vadd.xlane.f32.xlu0 %v422
        %v571 = vpop.xlane.xlu0 %570
        %572 = vadd.xlane.f32.xlu0 %v423
        %v573 = vpop.xlane.xlu0 %572
        %574 = vadd.xlane.f32.xlu0 %v424
        %v575 = vpop.xlane.xlu0 %574
        %576 = vadd.xlane.f32.xlu0 %v425
        %v577 = vpop.xlane.xlu0 %576
        %578 = vadd.xlane.f32.xlu0 %v426
        %v579 = vpop.xlane.xlu0 %578
        %580 = vadd.xlane.f32.xlu0 %v427
        %v581 = vpop.xlane.xlu0 %580
        %v582 = vadd.f32 %v558, %v567
        %v583 = vadd.f32 %v559, %v569
        %v584 = vadd.f32 %v560, %v571
        %v585 = vadd.f32 %v561, %v573
        %v586 = vadd.f32 %v562, %v575
        %v587 = vadd.f32 %v563, %v577
        %v588 = vadd.f32 %v564, %v579
        %v589 = vadd.f32 %v565, %v581
        %vm590 = vcmask 7168
        %591 = vst.msk [vmem:[%s4] sm:$0xff] %vm590, %v582
        %592 = vst.msk [vmem:[%s4 + $0x8] sm:$0xff] %vm590, %v583
        %593 = vst.msk [vmem:[%s4 + $0x10] sm:$0xff] %vm590, %v584
        %594 = vst.msk [vmem:[%s4 + $0x18] sm:$0xff] %vm590, %v585
        %595 = vst.msk [vmem:[%s4 + $0x20] sm:$0xff] %vm590, %v586
        %596 = vst.msk [vmem:[%s4 + $0x28] sm:$0xff] %vm590, %v587
        %597 = vst.msk [vmem:[%s4 + $0x30] sm:$0xff] %vm590, %v588
        %598 = vst.msk [vmem:[%s4 + $0x38] sm:$0xff] %vm590, %v589
        // Predicated region
        $region37: #{tpu_custom_call.1} parent=31 // pred_check
          %p599 = pneg %p112
        $region38: #{tpu_custom_call.1} parent=31 // pred_check_branch
          %601 = sbr.rel (%p599) target = $region40
        $region39: #{tpu_custom_call.1} parent=31 // pred_region
          %s603 = ssub.s32 1024, 1024
          %604 = vsyncadd [#allocation3], %s603
          %s605 = sshll.u32 [#allocation2], 4
          %s606 = int_to_ptr.vmem [resolvable:$true] %s605
          %611 = dma.vmem_to_hbm [thread:$0]  %s606, 1024, %s3, [#allocation3], 128, 128, 8
        $region40: #{tpu_custom_call.1} parent=31 // pred_fallthru
          _
        // Predicated region
        $region41: #{tpu_custom_call.1} parent=31 // pred_check
          %p612 = pneg %p133
        $region42: #{tpu_custom_call.1} parent=31 // pred_check_branch
          %614 = sbr.rel (%p612) target = $region44
        $region43: #{tpu_custom_call.1} parent=31 // pred_region
          _
        $region44: #{tpu_custom_call.1} parent=31 // pred_fallthru
          _
        // Predicated region
        $region45: #{tpu_custom_call.1} parent=31 // pred_check
          %p615 = pneg %p112
        $region46: #{tpu_custom_call.1} parent=31 // pred_check_branch
          %617 = sbr.rel (%p615) target = $region48
        $region47: #{tpu_custom_call.1} parent=31 // pred_region
          %618 = dma.done [#allocation3], 1024
        $region48: #{tpu_custom_call.1} parent=31 // pred_fallthru
          _
        // Predicated region
        $region49: #{tpu_custom_call.1} parent=31 // pred_check
          %p619 = pneg %p133
        $region50: #{tpu_custom_call.1} parent=31 // pred_check_branch
          %621 = sbr.rel (%p619) target = $region52
        $region51: #{tpu_custom_call.1} parent=31 // pred_region
          _
        $region52: #{tpu_custom_call.1} parent=31 // pred_fallthru
          _
      $region32: #{tpu_custom_call.1} parent=5 // pred_fallthru
        _
      %p622 = scmp.le.s32.totalorder 2, %s12
      // Predicated region
      $region53: #{tpu_custom_call.1} parent=5 // pred_check
        %p623 = pneg %p622
      $region54: #{tpu_custom_call.1} parent=5 // pred_check_branch
        %625 = sbr.rel (%p623) target = $region56
      $region55: #{tpu_custom_call.1} parent=5 // pred_region
        %s626 = ssub.s32 %s12, 2
      $region56: #{tpu_custom_call.1} parent=5 // pred_fallthru
        _
    $region6: #{tpu_custom_call.1} parent=1 // loop_footer
      %s16 = sadd.s32 1, %s12
    $region7: #{tpu_custom_call.1} parent=1 // loop_footer_branch
      %11 = sbr.rel target = $region3
    $region8: #{tpu_custom_call.1} parent=1 // loop_exit
      _
    %627 = vsyncpa [#allocation3], 1
    %s628 = scalar_lea.sflag [#allocation3], 1
    %629 = vsyncpa %s628, 1

</llo_original>
